<compile_context>
chip_gen: v5e
topology: v5e:2x2
jax: 0.10.0
libtpu: 0.0.40
codegen_flags: <defaults>
</compile_context>

<pallas_src>
import functools

import jax
import jax.numpy as jnp
from jax import lax
from jax.experimental import pallas as pl
from jax.experimental.pallas import tpu as pltpu


def _round_up(x, m):
    return ((x + m - 1) // m) * m


def delay_mlp_kernel(x_ref, w1_ref, b1_ref, w2_ref, b2_ref, w3_ref, b3_ref,
                     o_ref, *, mxu_dtype):
    """Fused 3-layer MLP: relu(x W1^T + b1) -> relu(. W2^T + b2) -> . W3^T + b3."""
    # Contract over the weight's last axis: z[t, d2] = sum_d1 a[t, d1] * w[d2, d1]
    dn = (((1,), (1,)), ((), ()))

    def matmul(a, w_ref):
        w = w_ref[...]
        if mxu_dtype is not None:
            a = a.astype(mxu_dtype)
            w = w.astype(mxu_dtype)
        return lax.dot_general(a, w, dn, preferred_element_type=jnp.float32)

    x = x_ref[...]
    h1 = jnp.maximum(matmul(x, w1_ref) + b1_ref[...], 0.0)
    h2 = jnp.maximum(matmul(h1, w2_ref) + b2_ref[...], 0.0)
    z3 = matmul(h2, w3_ref) + b3_ref[...]
    o_ref[...] = z3.astype(o_ref.dtype)


@functools.partial(jax.jit, static_argnames=("block_t", "mxu_dtype"))
def delay_mlp_forward(x, w1, b1, w2, b2, w3, b3, *, block_t=512, mxu_dtype=None):
    """x: (T, in_dim); w_i: PyTorch-layout (out, in); b_i: (1, out)."""
    t, in_dim = x.shape
    n_hidden = w1.shape[0]
    n_out = w3.shape[0]

    # --- padding for aligned K tiles and lane-dense output stores ----------
    # (In production the weight pads would be done once at parameter init, not
    #  per call; here the wrapper does them — under jit — so the demo stays
    #  self-contained.)
    k_pad = _round_up(in_dim, 128)      # 784 -> 896
    out_pad = _round_up(n_out, 128)     # 10  -> 128

    if k_pad != in_dim:
        x = jnp.pad(x, ((0, 0), (0, k_pad - in_dim)))
        w1 = jnp.pad(w1, ((0, 0), (0, k_pad - in_dim)))
    if out_pad != n_out:
        w3 = jnp.pad(w3, ((0, out_pad - n_out), (0, 0)))
        b3 = jnp.pad(b3, ((0, 0), (0, out_pad - n_out)))

    # --- tile the timestep axis ---------------------------------------------
    tm = min(block_t, _round_up(t, 8))
    tm = max(8, (tm // 8) * 8)
    t_pad = _round_up(t, tm)
    if t_pad != t:
        x = jnp.pad(x, ((0, t_pad - t), (0, 0)))
    grid = (t_pad // tm,)

    kernel = functools.partial(delay_mlp_kernel, mxu_dtype=mxu_dtype)

    out = pl.pallas_call(
        kernel,
        out_shape=jax.ShapeDtypeStruct((t_pad, out_pad), x.dtype),
        grid=grid,
        in_specs=[
            pl.BlockSpec((tm, k_pad), lambda i: (i, 0)),           # x tile (pipelined)
            pl.BlockSpec((n_hidden, k_pad), lambda i: (0, 0)),     # W1 (VMEM-resident)
            pl.BlockSpec((1, n_hidden), lambda i: (0, 0)),         # b1
            pl.BlockSpec((n_hidden, n_hidden), lambda i: (0, 0)),  # W2
            pl.BlockSpec((1, n_hidden), lambda i: (0, 0)),         # b2
            pl.BlockSpec((out_pad, n_hidden), lambda i: (0, 0)),   # W3 (lane-padded)
            pl.BlockSpec((1, out_pad), lambda i: (0, 0)),          # b3 (lane-padded)
        ],
        out_specs=pl.BlockSpec((tm, out_pad), lambda i: (i, 0)),
        compiler_params=pltpu.CompilerParams(
            dimension_semantics=("parallel",),   # v7x: split T across both TCs
        ),
    )(x, w1, b1, w2, b2, w3, b3)

    return out[:t, :n_out]


def xavier_uniform(key, shape):
    fan_out, fan_in = shape  # torch convention for a 2-D parameter
    bound = jnp.sqrt(6.0 / (fan_in + fan_out))
    return jax.random.uniform(key, shape, jnp.float32, -bound, bound)


def reference_forward(x, w1, b1, w2, b2, w3, b3):
    h1 = jnp.maximum(x @ w1.T + b1, 0.0)
    h2 = jnp.maximum(h1 @ w2.T + b2, 0.0)
    return h2 @ w3.T + b3


if __name__ == "__main__":
    # Shapes consistent with DelayMLP(cifar_10=False): in_dim = 28*28,
    # batch_size = T timesteps, n_hidden hidden units, 10 output classes.
    T = 8
    IN_DIM = 28 * 28
    N_HIDDEN = 32
    N_OUT = 10

    key = jax.random.PRNGKey(0)
    kx, k1, k2, k3, kb1, kb2, kb3 = jax.random.split(key, 7)

    x = jax.random.normal(kx, (T, IN_DIM), jnp.float32)

    # Deterministic xavier-uniform-style parameters (module's __init__ shapes).
    w1 = xavier_uniform(k1, (N_HIDDEN, IN_DIM))
    b1 = xavier_uniform(kb1, (1, N_HIDDEN))
    w2 = xavier_uniform(k2, (N_HIDDEN, N_HIDDEN))
    b2 = xavier_uniform(kb2, (1, N_HIDDEN))
    w3 = xavier_uniform(k3, (N_OUT, N_HIDDEN))
    b3 = xavier_uniform(kb3, (1, N_OUT))

    # TODO(synk): e_trace_mat / delta_mat and DelayedLinearFunction's custom
    # backward (history/grad funcs, sparse_inputs) are training-time only; the
    # forward pass does not use them.

    ref = reference_forward(x, w1, b1, w2, b2, w3, b3)

    # Default f32 path — exact forward semantics of the module.
    out = delay_mlp_forward(x, w1, b1, w2, b2, w3, b3)
    out = jax.block_until_ready(out)
    assert out.shape == (T, N_OUT)
    assert jnp.allclose(out, ref, atol=1e-4, rtol=1e-4)

    # bf16-MXU path (v6e/v7x win): dot operands in bf16, f32 accumulation and
    # f32 elementwise (bias add / ReLU), so v5e's VPU never sees bf16.
    out_bf16 = delay_mlp_forward(x, w1, b1, w2, b2, w3, b3,
                                 mxu_dtype=jnp.bfloat16)
    out_bf16 = jax.block_until_ready(out_bf16)
    assert out_bf16.shape == (T, N_OUT)
    assert jnp.allclose(out_bf16, ref, atol=0.25, rtol=0.25)

    print("KERNEL_OK")
</pallas_src>

<mosaic_0001>
module attributes {stable_mosaic.version = 11 : i64} {
  func.func @delay_mlp_kernel(%arg0: i32, %arg1: memref<8x896xf32, #tpu.memory_space<vmem>>, %arg2: memref<32x896xf32, #tpu.memory_space<vmem>>, %arg3: memref<1x32xf32, #tpu.memory_space<vmem>>, %arg4: memref<32x32xf32, #tpu.memory_space<vmem>>, %arg5: memref<1x32xf32, #tpu.memory_space<vmem>>, %arg6: memref<128x32xf32, #tpu.memory_space<vmem>>, %arg7: memref<1x128xf32, #tpu.memory_space<vmem>>, %arg8: memref<8x128xf32, #tpu.memory_space<vmem>>) attributes {dimension_semantics = [#tpu.dimension_semantics<parallel>], iteration_bounds = array<i64: 1>, scalar_prefetch = 0 : i64, scratch_operands = 0 : i64, tpu.core_type = #tpu.core_type<tc>, window_params = [{transform_indices = @transform_0, window_bounds = array<i64: 8, 896>}, {pipeline_mode = #tpu.pipeline_mode<synchronous>, transform_indices = @transform_1, window_bounds = array<i64: 32, 896>}, {pipeline_mode = #tpu.pipeline_mode<synchronous>, transform_indices = @transform_2, window_bounds = array<i64: 1, 32>}, {pipeline_mode = #tpu.pipeline_mode<synchronous>, transform_indices = @transform_3, window_bounds = array<i64: 32, 32>}, {pipeline_mode = #tpu.pipeline_mode<synchronous>, transform_indices = @transform_4, window_bounds = array<i64: 1, 32>}, {pipeline_mode = #tpu.pipeline_mode<synchronous>, transform_indices = @transform_5, window_bounds = array<i64: 128, 32>}, {pipeline_mode = #tpu.pipeline_mode<synchronous>, transform_indices = @transform_6, window_bounds = array<i64: 1, 128>}, {transform_indices = @transform_7, window_bounds = array<i64: 8, 128>}]} {
    %c0 = arith.constant 0 : index
    %c0_0 = arith.constant 0 : index
    %0 = vector.load %arg1[%c0, %c0_0] : memref<8x896xf32, #tpu.memory_space<vmem>>, vector<8x896xf32>
    %c0_1 = arith.constant 0 : index
    %c0_2 = arith.constant 0 : index
    %1 = vector.load %arg2[%c0_1, %c0_2] : memref<32x896xf32, #tpu.memory_space<vmem>>, vector<32x896xf32>
    %cst = arith.constant dense<0.000000e+00> : vector<8x32xf32>
    %2 = tpu.matmul %0, %1, %cst {dimension_numbers = #tpu.dot_dimension_numbers<[1], [1], [0], [0], [0, 0, 1, 0], [], []>} : vector<8x896xf32>, vector<32x896xf32>, vector<8x32xf32> -> vector<8x32xf32>
    %c0_3 = arith.constant 0 : index
    %c0_4 = arith.constant 0 : index
    %3 = vector.load %arg3[%c0_3, %c0_4] : memref<1x32xf32, #tpu.memory_space<vmem>>, vector<1x32xf32>
    %4 = vector.broadcast %3 : vector<1x32xf32> to vector<8x32xf32>
    %5 = arith.addf %2, %4 : vector<8x32xf32>
    %cst_5 = arith.constant 0.000000e+00 : f32
    %6 = vector.broadcast %cst_5 : f32 to vector<8x32xf32>
    %7 = arith.maximumf %5, %6 : vector<8x32xf32>
    %c0_6 = arith.constant 0 : index
    %c0_7 = arith.constant 0 : index
    %8 = vector.load %arg4[%c0_6, %c0_7] : memref<32x32xf32, #tpu.memory_space<vmem>>, vector<32x32xf32>
    %cst_8 = arith.constant dense<0.000000e+00> : vector<8x32xf32>
    %9 = tpu.matmul %7, %8, %cst_8 {dimension_numbers = #tpu.dot_dimension_numbers<[1], [1], [0], [0], [0, 0, 1, 0], [], []>} : vector<8x32xf32>, vector<32x32xf32>, vector<8x32xf32> -> vector<8x32xf32>
    %c0_9 = arith.constant 0 : index
    %c0_10 = arith.constant 0 : index
    %10 = vector.load %arg5[%c0_9, %c0_10] : memref<1x32xf32, #tpu.memory_space<vmem>>, vector<1x32xf32>
    %11 = vector.broadcast %10 : vector<1x32xf32> to vector<8x32xf32>
    %12 = arith.addf %9, %11 : vector<8x32xf32>
    %cst_11 = arith.constant 0.000000e+00 : f32
    %13 = vector.broadcast %cst_11 : f32 to vector<8x32xf32>
    %14 = arith.maximumf %12, %13 : vector<8x32xf32>
    %c0_12 = arith.constant 0 : index
    %c0_13 = arith.constant 0 : index
    %15 = vector.load %arg6[%c0_12, %c0_13] : memref<128x32xf32, #tpu.memory_space<vmem>>, vector<128x32xf32>
    %cst_14 = arith.constant dense<0.000000e+00> : vector<8x128xf32>
    %16 = tpu.matmul %14, %15, %cst_14 {dimension_numbers = #tpu.dot_dimension_numbers<[1], [1], [0], [0], [0, 0, 1, 0], [], []>} : vector<8x32xf32>, vector<128x32xf32>, vector<8x128xf32> -> vector<8x128xf32>
    %c0_15 = arith.constant 0 : index
    %c0_16 = arith.constant 0 : index
    %17 = vector.load %arg7[%c0_15, %c0_16] : memref<1x128xf32, #tpu.memory_space<vmem>>, vector<1x128xf32>
    %18 = vector.broadcast %17 : vector<1x128xf32> to vector<8x128xf32>
    %19 = arith.addf %16, %18 : vector<8x128xf32>
    %c0_17 = arith.constant 0 : index
    %c0_18 = arith.constant 0 : index
    %20 = vector.load %arg8[%c0_17, %c0_18] : memref<8x128xf32, #tpu.memory_space<vmem>>, vector<8x128xf32>
    tpu.vector_store %arg8[%c0_17, %c0_18], %19 {strides = array<i32>} : memref<8x128xf32, #tpu.memory_space<vmem>>, vector<8x128xf32>,
    return
  }
  func.func @transform_0(%arg0: i32) -> (i32, i32) {
    %c0_i32 = arith.constant 0 : i32
    %c0_i32_0 = arith.constant 0 : i32
    return %arg0, %c0_i32 : i32, i32
  }
  func.func @transform_1(%arg0: i32) -> (i32, i32) {
    %c0_i32 = arith.constant 0 : i32
    %c0_i32_0 = arith.constant 0 : i32
    %c0_i32_1 = arith.constant 0 : i32
    return %c0_i32, %c0_i32_0 : i32, i32
  }
  func.func @transform_2(%arg0: i32) -> (i32, i32) {
    %c0_i32 = arith.constant 0 : i32
    %c0_i32_0 = arith.constant 0 : i32
    %c0_i32_1 = arith.constant 0 : i32
    return %c0_i32, %c0_i32_0 : i32, i32
  }
  func.func @transform_3(%arg0: i32) -> (i32, i32) {
    %c0_i32 = arith.constant 0 : i32
    %c0_i32_0 = arith.constant 0 : i32
    %c0_i32_1 = arith.constant 0 : i32
    return %c0_i32, %c0_i32_0 : i32, i32
  }
  func.func @transform_4(%arg0: i32) -> (i32, i32) {
    %c0_i32 = arith.constant 0 : i32
    %c0_i32_0 = arith.constant 0 : i32
    %c0_i32_1 = arith.constant 0 : i32
    return %c0_i32, %c0_i32_0 : i32, i32
  }
  func.func @transform_5(%arg0: i32) -> (i32, i32) {
    %c0_i32 = arith.constant 0 : i32
    %c0_i32_0 = arith.constant 0 : i32
    %c0_i32_1 = arith.constant 0 : i32
    return %c0_i32, %c0_i32_0 : i32, i32
  }
  func.func @transform_6(%arg0: i32) -> (i32, i32) {
    %c0_i32 = arith.constant 0 : i32
    %c0_i32_0 = arith.constant 0 : i32
    %c0_i32_1 = arith.constant 0 : i32
    return %c0_i32, %c0_i32_0 : i32, i32
  }
  func.func @transform_7(%arg0: i32) -> (i32, i32) {
    %c0_i32 = arith.constant 0 : i32
    %c0_i32_0 = arith.constant 0 : i32
    return %arg0, %c0_i32 : i32, i32
  }
}

</mosaic_0001>

<llo_original>
// kernel: delay_mlp_forward.1
$region0: #{delay_mlp_forward.1}
  #allocation0 [shape = 'u32[]', space=smem, size = 0x4, offset = 0x4, fixed_abs, tag = 'smem constant byte address 0x4 - core index']
  #allocation1 [shape = 'u32[72,128]{1,0:T(1,128)}', space=vmem, size = 0x9000, scoped, tag = 'internal scratch']
  %s0 = inlined_call_operand.vmem [shape: f32[8,896], index: 0, kind: input, shape index: {}]
  %s1 = inlined_call_operand.vmem [shape: f32[32,896], index: 1, kind: input, shape index: {}]
  %s2 = inlined_call_operand.vmem [shape: f32[1,32], index: 2, kind: input, shape index: {}]
  %s3 = inlined_call_operand.vmem [shape: f32[32,32], index: 3, kind: input, shape index: {}]
  %s4 = inlined_call_operand.vmem [shape: f32[1,32], index: 4, kind: input, shape index: {}]
  %s5 = inlined_call_operand.vmem [shape: f32[128,32], index: 5, kind: input, shape index: {}]
  %s6 = inlined_call_operand.vmem [shape: f32[1,128], index: 6, kind: input, shape index: {}]
  %s7 = inlined_call_operand.hbm [shape: f32[8,128], index: 7, kind: output, shape index: {}]
  %s8 = sld [smem:[#allocation0]]
  $region38: #{delay_mlp_forward.1} parent=0
    _
  %s10 = ssub.s32 1, %s8
  %s11 = scalar_select 0, %s10, %s8
  $region1: #{delay_mlp_forward.1} parent=0
    #allocation2 [shape = 'u8[4096]{0}', space=vmem, size = 0x1000, scoped, tag = 'output window, operand 0, single buffered']
    #allocation3 [shape = 's32[1]{0}', space=sflag, size = 0x4, scoped, tag = 'scoped memory for delay_mlp_forward.1']
    %12 = vsyncpa [#allocation3], 0
    // Predicated region
    $region2: #{delay_mlp_forward.1} parent=1 // pred_check
      _
    $region3: #{delay_mlp_forward.1} parent=1 // pred_check_branch
      %14 = sbr.rel (0) target = $region5
    $region4: #{delay_mlp_forward.1} parent=1 // pred_region
      _
    $region5: #{delay_mlp_forward.1} parent=1 // pred_fallthru
      _
    // Predicated region
    $region6: #{delay_mlp_forward.1} parent=1 // pred_check
      _
    $region7: #{delay_mlp_forward.1} parent=1 // pred_check_branch
      %16 = sbr.rel (0) target = $region9
    $region8: #{delay_mlp_forward.1} parent=1 // pred_region
      _
    $region9: #{delay_mlp_forward.1} parent=1 // pred_fallthru
      _
    // Predicated region
    $region10: #{delay_mlp_forward.1} parent=1 // pred_check
      _
    $region11: #{delay_mlp_forward.1} parent=1 // pred_check_branch
      %18 = sbr.rel (0) target = $region13
    $region12: #{delay_mlp_forward.1} parent=1 // pred_region
      _
    $region13: #{delay_mlp_forward.1} parent=1 // pred_fallthru
      _
    // Predicated region
    $region14: #{delay_mlp_forward.1} parent=1 // pred_check
      _
    $region15: #{delay_mlp_forward.1} parent=1 // pred_check_branch
      %20 = sbr.rel (0) target = $region17
    $region16: #{delay_mlp_forward.1} parent=1 // pred_region
      _
    $region17: #{delay_mlp_forward.1} parent=1 // pred_fallthru
      _
    // Predicated region
    $region18: #{delay_mlp_forward.1} parent=1 // pred_check
      _
    $region19: #{delay_mlp_forward.1} parent=1 // pred_check_branch
      %22 = sbr.rel (0) target = $region21
    $region20: #{delay_mlp_forward.1} parent=1 // pred_region
      _
    $region21: #{delay_mlp_forward.1} parent=1 // pred_fallthru
      _
    // Predicated region
    $region22: #{delay_mlp_forward.1} parent=1 // pred_check
      _
    $region23: #{delay_mlp_forward.1} parent=1 // pred_check_branch
      %24 = sbr.rel (0) target = $region25
    $region24: #{delay_mlp_forward.1} parent=1 // pred_region
      _
    $region25: #{delay_mlp_forward.1} parent=1 // pred_fallthru
      _
    // Predicated region
    $region26: #{delay_mlp_forward.1} parent=1 // pred_check
      _
    $region27: #{delay_mlp_forward.1} parent=1 // pred_check_branch
      %26 = sbr.rel (0) target = $region29
    $region28: #{delay_mlp_forward.1} parent=1 // pred_region
      _
    $region29: #{delay_mlp_forward.1} parent=1 // pred_fallthru
      _
    %v27 = vld [vmem:[%s0] sm:$0xff]
    %v28 = vld [vmem:[%s0 + $0x8] sm:$0xff]
    %v29 = vld [vmem:[%s0 + $0x10] sm:$0xff]
    %v30 = vld [vmem:[%s0 + $0x18] sm:$0xff]
    %v31 = vld [vmem:[%s0 + $0x20] sm:$0xff]
    %v32 = vld [vmem:[%s0 + $0x28] sm:$0xff]
    %v33 = vld [vmem:[%s0 + $0x30] sm:$0xff]
    %v34 = vld [vmem:[%s1] sm:$0xff]
    %v35 = vld [vmem:[%s1 + $0x8] sm:$0xff]
    %v36 = vld [vmem:[%s1 + $0x10] sm:$0xff]
    %v37 = vld [vmem:[%s1 + $0x18] sm:$0xff]
    %v38 = vld [vmem:[%s1 + $0x20] sm:$0xff]
    %v39 = vld [vmem:[%s1 + $0x28] sm:$0xff]
    %v40 = vld [vmem:[%s1 + $0x30] sm:$0xff]
    %v41 = vld [vmem:[%s1 + $0x38] sm:$0xff]
    %v42 = vld [vmem:[%s1 + $0x40] sm:$0xff]
    %v43 = vld [vmem:[%s1 + $0x48] sm:$0xff]
    %v44 = vld [vmem:[%s1 + $0x50] sm:$0xff]
    %v45 = vld [vmem:[%s1 + $0x58] sm:$0xff]
    %v46 = vld [vmem:[%s1 + $0x60] sm:$0xff]
    %v47 = vld [vmem:[%s1 + $0x68] sm:$0xff]
    %v48 = vld [vmem:[%s1 + $0x70] sm:$0xff]
    %v49 = vld [vmem:[%s1 + $0x78] sm:$0xff]
    %v50 = vld [vmem:[%s1 + $0x80] sm:$0xff]
    %v51 = vld [vmem:[%s1 + $0x88] sm:$0xff]
    %v52 = vld [vmem:[%s1 + $0x90] sm:$0xff]
    %v53 = vld [vmem:[%s1 + $0x98] sm:$0xff]
    %v54 = vld [vmem:[%s1 + $0xa0] sm:$0xff]
    %v55 = vld [vmem:[%s1 + $0xa8] sm:$0xff]
    %v56 = vld [vmem:[%s1 + $0xb0] sm:$0xff]
    %v57 = vld [vmem:[%s1 + $0xb8] sm:$0xff]
    %v58 = vld [vmem:[%s1 + $0xc0] sm:$0xff]
    %v59 = vld [vmem:[%s1 + $0xc8] sm:$0xff]
    %v60 = vld [vmem:[%s1 + $0xd0] sm:$0xff]
    %v61 = vld [vmem:[%s1 + $0xd8] sm:$0xff]
    %v62 = vld [vmem:[%s2] sm:$0x1]
    %v64 = vperm.slane %v62, 0
    %66 = vmatpush.xpose.msra.mxu0 0.0
    %67 = vmatpush.xpose.msra.mxu0 0.0
    %68 = vmatpush.xpose.msra.mxu0 0.0
    %69 = vmatpush.xpose.msra.mxu0 0.0
    %70 = vmatpush.xpose.msra.mxu0 0.0
    %71 = vmatpush.xpose.msra.mxu0 0.0
    %72 = vmatpush.xpose.msra.mxu0 0.0
    %73 = vmatpush.xpose.msra.mxu0 0.0
    %74 = vmatpush.xpose.msra.mxu0 0.0
    %75 = vmatpush.xpose.msra.mxu0 0.0
    %76 = vmatpush.xpose.msra.mxu0 0.0
    %77 = vmatpush.xpose.msra.mxu0 0.0
    %78 = vmatpush.xpose.msra.mxu0 %v55
    %79 = vmatpush.xpose.msra.mxu0 %v48
    %80 = vmatpush.xpose.msra.mxu0 %v41
    %81 = vmatpush.xpose.msra.mxu0 %v34
    %82 = vmatmul.f32.gmra.mxu0 %v27
    %v83 = vpop.f32.mrf.mxu0
    %v84 = vadd.f32 %v64, %v83
    %85 = vdwg.mxu0
    %86 = vmatpush.xpose.msra.mxu0 0.0
    %87 = vmatpush.xpose.msra.mxu0 0.0
    %88 = vmatpush.xpose.msra.mxu0 0.0
    %89 = vmatpush.xpose.msra.mxu0 0.0
    %90 = vmatpush.xpose.msra.mxu0 0.0
    %91 = vmatpush.xpose.msra.mxu0 0.0
    %92 = vmatpush.xpose.msra.mxu0 0.0
    %93 = vmatpush.xpose.msra.mxu0 0.0
    %94 = vmatpush.xpose.msra.mxu0 0.0
    %95 = vmatpush.xpose.msra.mxu0 0.0
    %96 = vmatpush.xpose.msra.mxu0 0.0
    %97 = vmatpush.xpose.msra.mxu0 0.0
    %98 = vmatpush.xpose.msra.mxu0 %v56
    %99 = vmatpush.xpose.msra.mxu0 %v49
    %100 = vmatpush.xpose.msra.mxu0 %v42
    %101 = vmatpush.xpose.msra.mxu0 %v35
    %102 = vmatmul.f32.gmra.mxu0 %v28
    %v103 = vpop.f32.mrf.mxu0
    %v104 = vadd.f32 %v84, %v103
    %105 = vdwg.mxu0
    %106 = vmatpush.xpose.msra.mxu0 0.0
    %107 = vmatpush.xpose.msra.mxu0 0.0
    %108 = vmatpush.xpose.msra.mxu0 0.0
    %109 = vmatpush.xpose.msra.mxu0 0.0
    %110 = vmatpush.xpose.msra.mxu0 0.0
    %111 = vmatpush.xpose.msra.mxu0 0.0
    %112 = vmatpush.xpose.msra.mxu0 0.0
    %113 = vmatpush.xpose.msra.mxu0 0.0
    %114 = vmatpush.xpose.msra.mxu0 0.0
    %115 = vmatpush.xpose.msra.mxu0 0.0
    %116 = vmatpush.xpose.msra.mxu0 0.0
    %117 = vmatpush.xpose.msra.mxu0 0.0
    %118 = vmatpush.xpose.msra.mxu0 %v57
    %119 = vmatpush.xpose.msra.mxu0 %v50
    %120 = vmatpush.xpose.msra.mxu0 %v43
    %121 = vmatpush.xpose.msra.mxu0 %v36
    %122 = vmatmul.f32.gmra.mxu0 %v29
    %v123 = vpop.f32.mrf.mxu0
    %v124 = vadd.f32 %v104, %v123
    %125 = vdwg.mxu0
    %126 = vmatpush.xpose.msra.mxu0 0.0
    %127 = vmatpush.xpose.msra.mxu0 0.0
    %128 = vmatpush.xpose.msra.mxu0 0.0
    %129 = vmatpush.xpose.msra.mxu0 0.0
    %130 = vmatpush.xpose.msra.mxu0 0.0
    %131 = vmatpush.xpose.msra.mxu0 0.0
    %132 = vmatpush.xpose.msra.mxu0 0.0
    %133 = vmatpush.xpose.msra.mxu0 0.0
    %134 = vmatpush.xpose.msra.mxu0 0.0
    %135 = vmatpush.xpose.msra.mxu0 0.0
    %136 = vmatpush.xpose.msra.mxu0 0.0
    %137 = vmatpush.xpose.msra.mxu0 0.0
    %138 = vmatpush.xpose.msra.mxu0 %v58
    %139 = vmatpush.xpose.msra.mxu0 %v51
    %140 = vmatpush.xpose.msra.mxu0 %v44
    %141 = vmatpush.xpose.msra.mxu0 %v37
    %142 = vmatmul.f32.gmra.mxu0 %v30
    %v143 = vpop.f32.mrf.mxu0
    %v144 = vadd.f32 %v124, %v143
    %145 = vdwg.mxu0
    %146 = vmatpush.xpose.msra.mxu0 0.0
    %147 = vmatpush.xpose.msra.mxu0 0.0
    %148 = vmatpush.xpose.msra.mxu0 0.0
    %149 = vmatpush.xpose.msra.mxu0 0.0
    %150 = vmatpush.xpose.msra.mxu0 0.0
    %151 = vmatpush.xpose.msra.mxu0 0.0
    %152 = vmatpush.xpose.msra.mxu0 0.0
    %153 = vmatpush.xpose.msra.mxu0 0.0
    %154 = vmatpush.xpose.msra.mxu0 0.0
    %155 = vmatpush.xpose.msra.mxu0 0.0
    %156 = vmatpush.xpose.msra.mxu0 0.0
    %157 = vmatpush.xpose.msra.mxu0 0.0
    %158 = vmatpush.xpose.msra.mxu0 %v59
    %159 = vmatpush.xpose.msra.mxu0 %v52
    %160 = vmatpush.xpose.msra.mxu0 %v45
    %161 = vmatpush.xpose.msra.mxu0 %v38
    %162 = vmatmul.f32.gmra.mxu0 %v31
    %v163 = vpop.f32.mrf.mxu0
    %v164 = vadd.f32 %v144, %v163
    %165 = vdwg.mxu0
    %166 = vmatpush.xpose.msra.mxu0 0.0
    %167 = vmatpush.xpose.msra.mxu0 0.0
    %168 = vmatpush.xpose.msra.mxu0 0.0
    %169 = vmatpush.xpose.msra.mxu0 0.0
    %170 = vmatpush.xpose.msra.mxu0 0.0
    %171 = vmatpush.xpose.msra.mxu0 0.0
    %172 = vmatpush.xpose.msra.mxu0 0.0
    %173 = vmatpush.xpose.msra.mxu0 0.0
    %174 = vmatpush.xpose.msra.mxu0 0.0
    %175 = vmatpush.xpose.msra.mxu0 0.0
    %176 = vmatpush.xpose.msra.mxu0 0.0
    %177 = vmatpush.xpose.msra.mxu0 0.0
    %178 = vmatpush.xpose.msra.mxu0 %v60
    %179 = vmatpush.xpose.msra.mxu0 %v53
    %180 = vmatpush.xpose.msra.mxu0 %v46
    %181 = vmatpush.xpose.msra.mxu0 %v39
    %182 = vmatmul.f32.gmra.mxu0 %v32
    %v183 = vpop.f32.mrf.mxu0
    %v184 = vadd.f32 %v164, %v183
    %185 = vdwg.mxu0
    %186 = vmatpush.xpose.msra.mxu0 0.0
    %187 = vmatpush.xpose.msra.mxu0 0.0
    %188 = vmatpush.xpose.msra.mxu0 0.0
    %189 = vmatpush.xpose.msra.mxu0 0.0
    %190 = vmatpush.xpose.msra.mxu0 0.0
    %191 = vmatpush.xpose.msra.mxu0 0.0
    %192 = vmatpush.xpose.msra.mxu0 0.0
    %193 = vmatpush.xpose.msra.mxu0 0.0
    %194 = vmatpush.xpose.msra.mxu0 0.0
    %195 = vmatpush.xpose.msra.mxu0 0.0
    %196 = vmatpush.xpose.msra.mxu0 0.0
    %197 = vmatpush.xpose.msra.mxu0 0.0
    %198 = vmatpush.xpose.msra.mxu0 %v61
    %199 = vmatpush.xpose.msra.mxu0 %v54
    %200 = vmatpush.xpose.msra.mxu0 %v47
    %201 = vmatpush.xpose.msra.mxu0 %v40
    %202 = vmatmul.f32.gmra.mxu0 %v33
    %v203 = vpop.f32.mrf.mxu0
    %v204 = vadd.f32 %v184, %v203
    %205 = vdwg.mxu0
    %v206 = vmax.f32 %v204, 0.0
    %v207 = vld [vmem:[%s3] sm:$0xff]
    %v208 = vld [vmem:[%s3 + $0x8] sm:$0xff]
    %v209 = vld [vmem:[%s3 + $0x10] sm:$0xff]
    %v210 = vld [vmem:[%s3 + $0x18] sm:$0xff]
    %v211 = vld [vmem:[%s4] sm:$0x1]
    %v213 = vperm.slane %v211, 0
    %vm215 = vcmask 261120
    %v217 = vsel %vm215, %v206, 0
    %v220 = vsel %vm215, %v207, 0
    %v223 = vsel %vm215, %v208, 0
    %v226 = vsel %vm215, %v209, 0
    %v229 = vsel %vm215, %v210, 0
    %231 = vmatpush.xpose.msra.mxu0 0.0
    %232 = vmatpush.xpose.msra.mxu0 0.0
    %233 = vmatpush.xpose.msra.mxu0 0.0
    %234 = vmatpush.xpose.msra.mxu0 0.0
    %235 = vmatpush.xpose.msra.mxu0 0.0
    %236 = vmatpush.xpose.msra.mxu0 0.0
    %237 = vmatpush.xpose.msra.mxu0 0.0
    %238 = vmatpush.xpose.msra.mxu0 0.0
    %239 = vmatpush.xpose.msra.mxu0 0.0
    %240 = vmatpush.xpose.msra.mxu0 0.0
    %241 = vmatpush.xpose.msra.mxu0 0.0
    %242 = vmatpush.xpose.msra.mxu0 0.0
    %243 = vmatpush.xpose.msra.mxu0 %v229
    %244 = vmatpush.xpose.msra.mxu0 %v226
    %245 = vmatpush.xpose.msra.mxu0 %v223
    %246 = vmatpush.xpose.msra.mxu0 %v220
    %247 = vmatmul.f32.gmra.mxu0 %v217
    %v248 = vpop.f32.mrf.mxu0
    %v249 = vadd.f32 %v213, %v248
    %250 = vdwg.mxu0
    %v251 = vmax.f32 %v249, 0.0
    %v252 = vld [vmem:[%s5] sm:$0xff]
    %v253 = vld [vmem:[%s5 + $0x8] sm:$0xff]
    %v254 = vld [vmem:[%s5 + $0x10] sm:$0xff]
    %v255 = vld [vmem:[%s5 + $0x18] sm:$0xff]
    %v256 = vld [vmem:[%s5 + $0x20] sm:$0xff]
    %v257 = vld [vmem:[%s5 + $0x28] sm:$0xff]
    %v258 = vld [vmem:[%s5 + $0x30] sm:$0xff]
    %v259 = vld [vmem:[%s5 + $0x38] sm:$0xff]
    %v260 = vld [vmem:[%s5 + $0x40] sm:$0xff]
    %v261 = vld [vmem:[%s5 + $0x48] sm:$0xff]
    %v262 = vld [vmem:[%s5 + $0x50] sm:$0xff]
    %v263 = vld [vmem:[%s5 + $0x58] sm:$0xff]
    %v264 = vld [vmem:[%s5 + $0x60] sm:$0xff]
    %v265 = vld [vmem:[%s5 + $0x68] sm:$0xff]
    %v266 = vld [vmem:[%s5 + $0x70] sm:$0xff]
    %v267 = vld [vmem:[%s5 + $0x78] sm:$0xff]
    %v268 = vld [vmem:[%s6] sm:$0x1]
    %v270 = vperm.slane %v268, 0
    %v273 = vsel %vm215, %v251, 0
    %v276 = vsel %vm215, %v252, 0
    %v279 = vsel %vm215, %v253, 0
    %v282 = vsel %vm215, %v254, 0
    %v285 = vsel %vm215, %v255, 0
    %v288 = vsel %vm215, %v256, 0
    %v291 = vsel %vm215, %v257, 0
    %v294 = vsel %vm215, %v258, 0
    %v297 = vsel %vm215, %v259, 0
    %v300 = vsel %vm215, %v260, 0
    %v303 = vsel %vm215, %v261, 0
    %v306 = vsel %vm215, %v262, 0
    %v309 = vsel %vm215, %v263, 0
    %v312 = vsel %vm215, %v264, 0
    %v315 = vsel %vm215, %v265, 0
    %v318 = vsel %vm215, %v266, 0
    %v321 = vsel %vm215, %v267, 0
    %323 = vmatpush.xpose.msra.mxu0 %v321
    %324 = vmatpush.xpose.msra.mxu0 %v318
    %325 = vmatpush.xpose.msra.mxu0 %v315
    %326 = vmatpush.xpose.msra.mxu0 %v312
    %327 = vmatpush.xpose.msra.mxu0 %v309
    %328 = vmatpush.xpose.msra.mxu0 %v306
    %329 = vmatpush.xpose.msra.mxu0 %v303
    %330 = vmatpush.xpose.msra.mxu0 %v300
    %331 = vmatpush.xpose.msra.mxu0 %v297
    %332 = vmatpush.xpose.msra.mxu0 %v294
    %333 = vmatpush.xpose.msra.mxu0 %v291
    %334 = vmatpush.xpose.msra.mxu0 %v288
    %335 = vmatpush.xpose.msra.mxu0 %v285
    %336 = vmatpush.xpose.msra.mxu0 %v282
    %337 = vmatpush.xpose.msra.mxu0 %v279
    %338 = vmatpush.xpose.msra.mxu0 %v276
    %339 = vmatmul.f32.gmra.mxu0 %v273
    %v340 = vpop.f32.mrf.mxu0
    %v341 = vadd.f32 %v270, %v340
    %342 = vdwg.mxu0
    %343 = vst [vmem:[#allocation2] sm:$0xff] %v341
    // Predicated region
    $region30: #{delay_mlp_forward.1} parent=1 // pred_check
      _
    $region31: #{delay_mlp_forward.1} parent=1 // pred_check_branch
      %345 = sbr.rel (0) target = $region33
    $region32: #{delay_mlp_forward.1} parent=1 // pred_region
      %347 = vsyncadd [#allocation3], 0
      %s349 = sshll.u32 [#allocation2], 4
      %s350 = int_to_ptr.vmem [resolvable:$true] %s349
      %s351 = sshll.u32 %s7, 4
      %s352 = int_to_ptr.hbm [resolvable:$true] %s351
      %354 = dma.vmem_to_hbm [thread:$0]  %s350, 128, %s352, [#allocation3]
    $region33: #{delay_mlp_forward.1} parent=1 // pred_fallthru
      _
    // Predicated region
    $region34: #{delay_mlp_forward.1} parent=1 // pred_check
      _
    $region35: #{delay_mlp_forward.1} parent=1 // pred_check_branch
      %356 = sbr.rel (0) target = $region37
    $region36: #{delay_mlp_forward.1} parent=1 // pred_region
      %358 = dma.done [#allocation3], 128
    $region37: #{delay_mlp_forward.1} parent=1 // pred_fallthru
      _
    %359 = vsyncpa [#allocation3], 1

</llo_original>
